<compile_context>
chip_gen: v7x
topology: tpu7x:2x2x1
jax: 0.10.0
libtpu: 0.0.40
codegen_flags: <defaults>
</compile_context>

<pallas_src>
import functools

import jax
import jax.numpy as jnp
from jax.experimental import pallas as pl
from jax.experimental.pallas import tpu as pltpu

NEG_SLOPE = 0.2


def _round_up(a, b):
    return ((a + b - 1) // b) * b


def _vmem_budgets():
    """Per-generation VMEM budgets (v7x: 64 MiB/TC, v5e/v6e: 128 MiB)."""
    cap = 64 * 1024 * 1024                      # assume most restrictive (v7x) if query fails
    try:
        q = int(pltpu.get_tpu_info().vmem_capacity_bytes)
        if q > 0:
            cap = q
    except Exception:
        pass
    tile_budget = cap // 2                      # working-set budget used for tile selection
    vmem_limit = min((cap * 3) // 4, 100 * 1024 * 1024)
    return tile_budget, vmem_limit


def _pick_tile_n(n, heads, f_aug_max, out_dim_max, budget_bytes):
    """Pick the target-row tile size against the per-generation VMEM budget."""
    best_t, best_key = None, None
    for t in (128, 256, 512, 1024):
        n_pad = _round_up(n, t)
        # resident (double-buffered by BlockSpec): h_aug bf16 + a_src^T f32
        resident = 2 * n_pad * heads * f_aug_max * 2 + 2 * heads * n_pad * 4
        # per tile: int8 adj (double-buffered) + ~3 live [T, Np] f32 temporaries
        # + bf16 p + double-buffered output tile
        per_tile = (2 * t * n_pad * 1 + 3 * t * n_pad * 4 + t * n_pad * 2
                    + 2 * t * out_dim_max * 4)
        if resident + per_tile > budget_bytes:
            continue
        key = (n_pad, -t)                       # least padding first, then the largest tile
        if best_key is None or key < best_key:
            best_t, best_key = t, key
    if best_t is None:
        # TODO(synk): column-tiled online-softmax stage B bounds VMEM at
        # O(TILE_N * TILE_K) independent of graph size; required for huge graphs.
        raise NotImplementedError(
            "Graph too large for the row-resident GAT formulation on this TPU's VMEM.")
    return best_t


# --------------------------- kernel A: projection ---------------------------
def _gat_project_kernel(x_ref, w_ref, acat_ref, haug_ref, asrc_t_ref, adst_ref,
                        *, heads, f_out, f_aug):
    h = jnp.dot(x_ref[...], w_ref[...], preferred_element_type=jnp.float32)   # [T, H*F]
    # fused src/dst attention-score matmul: one MXU push instead of two
    scores = jnp.dot(h, acat_ref[...], preferred_element_type=jnp.float32)    # [T, 2H]
    adst_ref[...] = scores[:, heads:]
    # hoist the (small) transpose here, once per row tile, out of the attention kernel
    asrc_t_ref[...] = jnp.transpose(scores[:, :heads])                        # [H, T]

    # Augmented bf16 aggregation operand: per head [h_head | 1 | 0-pad].
    # The ones column folds the softmax denominator into the aggregation matmul;
    # bf16 operands run the MXU at native rate and halve the resident footprint.
    t = h.shape[0]
    ones = jnp.ones((t, 1), jnp.float32)
    pad_w = f_aug - f_out - 1
    if pad_w > 0:
        pad_cols = jnp.concatenate(
            [ones, jnp.zeros((t, pad_w), jnp.float32)], axis=-1)
    else:
        pad_cols = ones
    parts = []
    for hd in range(heads):
        parts.append(h[:, hd * f_out:(hd + 1) * f_out])
        parts.append(pad_cols)
    haug_ref[...] = jnp.concatenate(parts, axis=-1).astype(haug_ref.dtype)    # one wide store


# ----------------------- kernel B: attention + aggregate ---------------------
def _gat_attend_kernel(adj_ref, asrc_t_ref, adst_ref, haug_ref, bias_ref, out_ref,
                       *, heads, f_out, f_aug, concat, apply_relu, apply_log_softmax):
    # int8 0/1 adjacency -> 1-bit neighbour mask (the widening is transient; only
    # the mask stays live across the per-head loop, not an f32 copy of adj).
    mask = adj_ref[...].astype(jnp.float32) != 0.0            # [T, Np]
    a_dst = adst_ref[...]                                     # [T, H]   f32
    a_src_t = asrc_t_ref[...]                                 # [H, Np]  f32

    # Closed-form row-max bound: leaky_relu is monotone, so
    #   max_j leaky(a_dst_i + a_src_j) = leaky(a_dst_i + max_j a_src_j).
    # One [H, Np] reduce per tile replaces one [T, Np] XLU reduce per head.
    # NOTE: like the reference-free bound of v2 this maximises over ALL sources
    # (including masked-out ones); if every valid neighbour's score were far
    # below it, the masked exp could underflow (documented numerics divergence).
    src_max = jnp.max(a_src_t, axis=1, keepdims=True)          # [H, 1]

    head_outs = []
    for hd in range(heads):
        e = a_dst[:, hd:hd + 1] + a_src_t[hd:hd + 1, :]        # [T, Np]
        e = jnp.maximum(e, NEG_SLOPE * e)                       # leaky_relu(., 0.2)
        m = a_dst[:, hd:hd + 1] + src_max[hd:hd + 1, :]         # [T, 1]
        m = jnp.maximum(m, NEG_SLOPE * m)
        # e <= m pointwise -> exp never overflows; masked entries contribute 0.
        # Softmax elementwise math stays f32 (safe on v5e, which has no bf16 VPU/EUP);
        # only the MXU operands are bf16.
        p = jnp.where(mask, jnp.exp(e - m), 0.0).astype(jnp.bfloat16)
        # One bf16 MXU matmul per head; the trailing ones column of h_aug produces
        # the softmax denominator for free (no [T, Np] XLU row-sum), and the
        # normalisation is applied AFTER the matmul on a [T, F] slab instead of a
        # [T, Np] broadcast-multiply before it.
        res = jnp.dot(p, haug_ref[:, hd * f_aug:(hd + 1) * f_aug],
                      preferred_element_type=jnp.float32)       # [T, F_aug]
        denom = res[:, f_out:f_out + 1]                         # [T, 1]
        inv = pl.reciprocal(jnp.maximum(denom, 1e-16), approx=True)   # EUP, [T, 1]
        head_outs.append(res[:, :f_out] * inv)                  # deg==0 rows -> 0

    if concat:
        out = jnp.concatenate(head_outs, axis=-1)               # [T, H*F]
    else:
        out = head_outs[0]
        for ho in head_outs[1:]:
            out = out + ho
        out = out * (1.0 / heads)
    out = out + bias_ref[...]
    if apply_relu:
        out = jnp.maximum(out, 0.0)
    if apply_log_softmax:
        mx = jnp.max(out, axis=-1, keepdims=True)
        z = out - mx
        out = z - jnp.log(jnp.sum(jnp.exp(z), axis=-1, keepdims=True))
    # single wide store per tile (no per-head narrow masked stores)
    out_ref[...] = out.astype(out_ref.dtype)


# ------------------------------ layer wrapper --------------------------------
def gat_conv(x, adj, params, *, tile_n, vmem_limit, heads, f_out, concat,
             apply_relu, apply_log_softmax):
    w, a_cat, bias = params
    n_pad, f_in = x.shape
    hf = heads * f_out
    f_aug = _round_up(f_out + 1, 8)        # aligned per-head stride of h_aug
    grid_rows = n_pad // tile_n
    cparams = pltpu.CompilerParams(
        dimension_semantics=("parallel",),          # megacore / v7x 2-TC row split
        vmem_limit_bytes=int(vmem_limit))

    # ---- stage A: projection + fused attention-score matmul (tiled over rows)
    h_aug, a_src_t, a_dst = pl.pallas_call(
        functools.partial(_gat_project_kernel, heads=heads, f_out=f_out, f_aug=f_aug),
        out_shape=(jax.ShapeDtypeStruct((n_pad, heads * f_aug), jnp.bfloat16),
                   jax.ShapeDtypeStruct((heads, n_pad), jnp.float32),
                   jax.ShapeDtypeStruct((n_pad, heads), jnp.float32)),
        grid=(grid_rows,),
        in_specs=[
            pl.BlockSpec((tile_n, f_in), lambda i: (i, 0)),
            pl.BlockSpec(w.shape, lambda i: (0, 0)),
            pl.BlockSpec(a_cat.shape, lambda i: (0, 0)),
        ],
        out_specs=(
            pl.BlockSpec((tile_n, heads * f_aug), lambda i: (i, 0)),
            pl.BlockSpec((heads, tile_n), lambda i: (0, i)),
            pl.BlockSpec((tile_n, heads), lambda i: (i, 0)),
        ),
        compiler_params=cparams,
    )(x, w, a_cat)

    out_dim = hf if concat else f_out

    # ---- stage B: attention + aggregation, tiled over target-node rows
    out = pl.pallas_call(
        functools.partial(_gat_attend_kernel, heads=heads, f_out=f_out, f_aug=f_aug,
                          concat=concat, apply_relu=apply_relu,
                          apply_log_softmax=apply_log_softmax),
        out_shape=jax.ShapeDtypeStruct((n_pad, out_dim), jnp.float32),
        grid=(grid_rows,),
        in_specs=[
            pl.BlockSpec((tile_n, n_pad), lambda i: (i, 0)),        # adj tile (int8)
            pl.BlockSpec((heads, n_pad), lambda i: (0, 0)),         # a_src^T (resident)
            pl.BlockSpec((tile_n, heads), lambda i: (i, 0)),        # a_dst tile
            pl.BlockSpec((n_pad, heads * f_aug), lambda i: (0, 0)), # h_aug bf16 (resident)
            pl.BlockSpec(bias.shape, lambda i: (0, 0)),             # bias
        ],
        out_specs=pl.BlockSpec((tile_n, out_dim), lambda i: (i, 0)),
        compiler_params=cparams,
    )(adj, a_src_t, a_dst, h_aug, bias)
    return out


# ------------------------------- params / model -------------------------------
def init_gat_conv_params(key, f_in, f_out, heads, concat):
    k1, k2, k3, k4 = jax.random.split(key, 4)
    lim_w = (6.0 / (f_in + heads * f_out)) ** 0.5
    w = jax.random.uniform(k1, (f_in, heads * f_out), jnp.float32, -lim_w, lim_w)
    lim_a = (6.0 / (1 + f_out)) ** 0.5
    att_src = jax.random.uniform(k2, (heads, f_out), jnp.float32, -lim_a, lim_a)
    att_dst = jax.random.uniform(k3, (heads, f_out), jnp.float32, -lim_a, lim_a)
    # Block-diagonal packing of the per-head attention vectors; src and dst
    # concatenated into one [H*F_out, 2H] matrix -> one fused MXU matmul.
    asrc_blk = jnp.zeros((heads * f_out, heads), jnp.float32)
    adst_blk = jnp.zeros((heads * f_out, heads), jnp.float32)
    for h in range(heads):
        asrc_blk = asrc_blk.at[h * f_out:(h + 1) * f_out, h].set(att_src[h])
        adst_blk = adst_blk.at[h * f_out:(h + 1) * f_out, h].set(att_dst[h])
    a_cat = jnp.concatenate([asrc_blk, adst_blk], axis=1)          # [H*F_out, 2H]
    out_dim = heads * f_out if concat else f_out
    bias = 0.01 * jax.random.normal(k4, (1, out_dim), jnp.float32)
    return (w, a_cat, bias)


def build_gat(key, in_channels, hidden_channels, out_channels, heads, num_layers):
    """Mirrors GAT.__init__ layer construction exactly."""
    cfgs = []
    for i in range(num_layers):
        if i == 0:
            cfgs.append(dict(f_in=in_channels, f_out=hidden_channels, heads=heads, concat=True))
        cfgs.append(dict(f_in=hidden_channels * heads, f_out=hidden_channels, heads=heads, concat=True))
        if i == num_layers - 1:
            cfgs.append(dict(f_in=hidden_channels * heads, f_out=out_channels, heads=heads, concat=False))
    params = []
    for k, c in zip(jax.random.split(key, len(cfgs)), cfgs):
        params.append(init_gat_conv_params(k, c["f_in"], c["f_out"], c["heads"], c["concat"]))
    return params, cfgs


def gat_forward(x, adj, layer_params, layer_cfgs):
    # F.dropout with p=0.0 / eval mode is identity, so it is omitted.
    n = x.shape[0]
    heads = layer_cfgs[0]["heads"]
    f_aug_max = max(_round_up(c["f_out"] + 1, 8) for c in layer_cfgs)
    out_dim_max = max((c["heads"] * c["f_out"]) if c["concat"] else c["f_out"]
                      for c in layer_cfgs)
    tile_budget, vmem_limit = _vmem_budgets()
    tile_n = _pick_tile_n(n, heads, f_aug_max, out_dim_max, tile_budget)
    n_pad = _round_up(n, tile_n)

    x_p = jnp.zeros((n_pad, x.shape[1]), jnp.float32).at[:n, :].set(x)
    # int8 adjacency mask (values are exactly 0/1) -> half the HBM stream of bf16.
    adj_p = jnp.zeros((n_pad, n_pad), jnp.int8).at[:n, :n].set(adj.astype(jnp.int8))
    # TODO(synk): adj_p is re-streamed from HBM once per GATConv layer; a fused
    # multi-layer kernel could reuse the adjacency tile stream, but per-layer
    # calls keep VMEM bounded on v7x (64 MiB/TC).

    n_layers = len(layer_params)
    h = x_p
    for i, (params, cfg) in enumerate(zip(layer_params, layer_cfgs)):
        last = (i == n_layers - 1)
        h = gat_conv(h, adj_p, params, tile_n=tile_n, vmem_limit=vmem_limit,
                     heads=cfg["heads"], f_out=cfg["f_out"], concat=cfg["concat"],
                     apply_relu=not last, apply_log_softmax=last)
    return h[:n]


# ----------------------- pure-JAX reference (for checking) -----------------------
def _gat_conv_ref(x, adj, params, *, heads, f_out, concat, apply_relu, apply_log_softmax):
    w, a_cat, bias = params
    asrc_blk, adst_blk = a_cat[:, :heads], a_cat[:, heads:]
    h = jnp.dot(x, w, precision="highest")
    a_src = jnp.dot(h, asrc_blk, precision="highest")
    a_dst = jnp.dot(h, adst_blk, precision="highest")
    outs = []
    for hd in range(heads):
        e = a_dst[:, hd:hd + 1] + a_src[:, hd][None, :]
        e = jnp.where(e > 0, e, NEG_SLOPE * e)
        e = jnp.where(adj > 0, e, -1e30)
        m = jnp.max(e, axis=1, keepdims=True)
        p = jnp.exp(e - m) * adj
        alpha = p / jnp.maximum(p.sum(axis=1, keepdims=True), 1e-16)
        outs.append(jnp.dot(alpha, h[:, hd * f_out:(hd + 1) * f_out], precision="highest"))
    out = jnp.concatenate(outs, -1) if concat else sum(outs) / heads
    out = out + bias
    if apply_relu:
        out = jnp.maximum(out, 0.0)
    if apply_log_softmax:
        out = out - jax.scipy.special.logsumexp(out, axis=-1, keepdims=True)
    return out


def gat_forward_ref(x, adj, layer_params, layer_cfgs):
    n_layers = len(layer_params)
    for i, (params, cfg) in enumerate(zip(layer_params, layer_cfgs)):
        last = (i == n_layers - 1)
        x = _gat_conv_ref(x, adj, params,
                          heads=cfg["heads"], f_out=cfg["f_out"], concat=cfg["concat"],
                          apply_relu=not last, apply_log_softmax=last)
    return x


# TODO(synk): GAT.inference() (subgraph_loader mini-batched inference) is host-side
# data-loader logic, not a kernel; only the forward() hot path is implemented here.

if __name__ == "__main__":
    key = jax.random.PRNGKey(0)
    k_x, k_e, k_p = jax.random.split(key, 3)

    N = 300           # nodes (pads to 384 -> 3 row tiles of 128: exercises the grid)
    IN_C = 16         # in_channels
    HID = 8           # hidden_channels
    OUT_C = 8         # out_channels
    HEADS = 4
    NUM_LAYERS = 2
    NUM_EDGES = 1024

    x = jax.random.normal(k_x, (N, IN_C), jnp.float32)

    # edge_index like PyG: row 0 = source nodes, row 1 = target nodes
    src = jax.random.randint(jax.random.fold_in(k_e, 0), (NUM_EDGES,), 0, N)
    dst = jax.random.randint(jax.random.fold_in(k_e, 1), (NUM_EDGES,), 0, N)
    edge_index = jnp.stack([src, dst])                          # [2, E]
    adj = jnp.zeros((N, N), jnp.float32).at[dst, src].set(1.0)  # adj[target, source]

    params, cfgs = build_gat(k_p, IN_C, HID, OUT_C, HEADS, NUM_LAYERS)

    out = gat_forward(x, adj, params, cfgs)
    out = jax.block_until_ready(out)

    ref = gat_forward_ref(x, adj, params, cfgs)

    assert out.shape == (N, OUT_C), out.shape
    assert bool(jnp.all(jnp.isfinite(out)))
    # log_softmax rows must exponentiate-sum to 1
    assert bool(jnp.allclose(jnp.sum(jnp.exp(out), axis=-1), 1.0, atol=1e-3))
    # bf16 aggregation operands (h, p) + EUP approx-reciprocal vs f32 reference
    # over 4 stacked GATConv layers -> relaxed tolerance.
    assert bool(jnp.allclose(out, ref, atol=5e-2, rtol=5e-2))

    print("KERNEL_OK")
</pallas_src>

<mosaic_0001>
module attributes {stable_mosaic.version = 11 : i64} {
  func.func @_gat_project_kernel(%arg0: i32, %arg1: memref<128x16xf32, #tpu.memory_space<vmem>>, %arg2: memref<16x32xf32, #tpu.memory_space<vmem>>, %arg3: memref<32x8xf32, #tpu.memory_space<vmem>>, %arg4: memref<128x64xbf16, #tpu.memory_space<vmem>>, %arg5: memref<4x128xf32, #tpu.memory_space<vmem>>, %arg6: memref<128x4xf32, #tpu.memory_space<vmem>>) attributes {dimension_semantics = [#tpu.dimension_semantics<parallel>], iteration_bounds = array<i64: 3>, scalar_prefetch = 0 : i64, scratch_operands = 0 : i64, tpu.core_type = #tpu.core_type<tc>, window_params = [{transform_indices = @transform_0, window_bounds = array<i64: 128, 16>}, {pipeline_mode = #tpu.pipeline_mode<synchronous>, transform_indices = @transform_1, window_bounds = array<i64: 16, 32>}, {pipeline_mode = #tpu.pipeline_mode<synchronous>, transform_indices = @transform_2, window_bounds = array<i64: 32, 8>}, {transform_indices = @transform_3, window_bounds = array<i64: 128, 64>}, {transform_indices = @transform_4, window_bounds = array<i64: 4, 128>}, {transform_indices = @transform_5, window_bounds = array<i64: 128, 4>}]} {
    %c0 = arith.constant 0 : index
    %c0_0 = arith.constant 0 : index
    %0 = vector.load %arg1[%c0, %c0_0] : memref<128x16xf32, #tpu.memory_space<vmem>>, vector<128x16xf32>
    %c0_1 = arith.constant 0 : index
    %c0_2 = arith.constant 0 : index
    %1 = vector.load %arg2[%c0_1, %c0_2] : memref<16x32xf32, #tpu.memory_space<vmem>>, vector<16x32xf32>
    %cst = arith.constant dense<0.000000e+00> : vector<128x32xf32>
    %2 = tpu.matmul %0, %1, %cst {dimension_numbers = #tpu.dot_dimension_numbers<[1], [0], [0], [1], [0, 0, 1, 1], [], []>} : vector<128x16xf32>, vector<16x32xf32>, vector<128x32xf32> -> vector<128x32xf32>
    %c0_3 = arith.constant 0 : index
    %c0_4 = arith.constant 0 : index
    %3 = vector.load %arg3[%c0_3, %c0_4] : memref<32x8xf32, #tpu.memory_space<vmem>>, vector<32x8xf32>
    %cst_5 = arith.constant dense<0.000000e+00> : vector<128x8xf32>
    %4 = tpu.matmul %2, %3, %cst_5 {dimension_numbers = #tpu.dot_dimension_numbers<[1], [0], [0], [1], [0, 0, 1, 1], [], []>} : vector<128x32xf32>, vector<32x8xf32>, vector<128x8xf32> -> vector<128x8xf32>
    %5 = vector.extract_strided_slice %4 {offsets = [0, 4], sizes = [128, 4], strides = [1, 1]} : vector<128x8xf32> to vector<128x4xf32>
    %c0_6 = arith.constant 0 : index
    %c0_7 = arith.constant 0 : index
    %6 = vector.load %arg6[%c0_6, %c0_7] : memref<128x4xf32, #tpu.memory_space<vmem>>, vector<128x4xf32>
    tpu.vector_store %arg6[%c0_6, %c0_7], %5 {strides = array<i32>} : memref<128x4xf32, #tpu.memory_space<vmem>>, vector<128x4xf32>,
    %7 = vector.extract_strided_slice %4 {offsets = [0, 0], sizes = [128, 4], strides = [1, 1]} : vector<128x8xf32> to vector<128x4xf32>
    %8 = tpu.transpose %7, [1, 0] : vector<128x4xf32> -> vector<4x128xf32>
    %c0_8 = arith.constant 0 : index
    %c0_9 = arith.constant 0 : index
    %9 = vector.load %arg5[%c0_8, %c0_9] : memref<4x128xf32, #tpu.memory_space<vmem>>, vector<4x128xf32>
    tpu.vector_store %arg5[%c0_8, %c0_9], %8 {strides = array<i32>} : memref<4x128xf32, #tpu.memory_space<vmem>>, vector<4x128xf32>,
    %cst_10 = arith.constant 1.000000e+00 : f32
    %10 = vector.broadcast %cst_10 : f32 to vector<128x1xf32>
    %cst_11 = arith.constant 0.000000e+00 : f32
    %11 = vector.broadcast %cst_11 : f32 to vector<128x7xf32>
    %12 = tpu.concatenate %10, %11 in 1 : vector<128x1xf32>, vector<128x7xf32> -> vector<128x8xf32>
    %13 = vector.extract_strided_slice %2 {offsets = [0, 0], sizes = [128, 8], strides = [1, 1]} : vector<128x32xf32> to vector<128x8xf32>
    %14 = vector.extract_strided_slice %2 {offsets = [0, 8], sizes = [128, 8], strides = [1, 1]} : vector<128x32xf32> to vector<128x8xf32>
    %15 = vector.extract_strided_slice %2 {offsets = [0, 16], sizes = [128, 8], strides = [1, 1]} : vector<128x32xf32> to vector<128x8xf32>
    %16 = vector.extract_strided_slice %2 {offsets = [0, 24], sizes = [128, 8], strides = [1, 1]} : vector<128x32xf32> to vector<128x8xf32>
    %17 = tpu.concatenate %13, %12, %14, %12, %15, %12, %16, %12 in 1 : vector<128x8xf32>, vector<128x8xf32>, vector<128x8xf32>, vector<128x8xf32>, vector<128x8xf32>, vector<128x8xf32>, vector<128x8xf32>, vector<128x8xf32> -> vector<128x64xf32>
    %18 = arith.truncf %17 : vector<128x64xf32> to vector<128x64xbf16>
    %c0_12 = arith.constant 0 : index
    %c0_13 = arith.constant 0 : index
    %19 = vector.load %arg4[%c0_12, %c0_13] : memref<128x64xbf16, #tpu.memory_space<vmem>>, vector<128x64xbf16>
    tpu.vector_store %arg4[%c0_12, %c0_13], %18 {strides = array<i32>} : memref<128x64xbf16, #tpu.memory_space<vmem>>, vector<128x64xbf16>,
    return
  }
  func.func @transform_0(%arg0: i32) -> (i32, i32) {
    %c0_i32 = arith.constant 0 : i32
    %c0_i32_0 = arith.constant 0 : i32
    return %arg0, %c0_i32 : i32, i32
  }
  func.func @transform_1(%arg0: i32) -> (i32, i32) {
    %c0_i32 = arith.constant 0 : i32
    %c0_i32_0 = arith.constant 0 : i32
    %c0_i32_1 = arith.constant 0 : i32
    return %c0_i32, %c0_i32_0 : i32, i32
  }
  func.func @transform_2(%arg0: i32) -> (i32, i32) {
    %c0_i32 = arith.constant 0 : i32
    %c0_i32_0 = arith.constant 0 : i32
    %c0_i32_1 = arith.constant 0 : i32
    return %c0_i32, %c0_i32_0 : i32, i32
  }
  func.func @transform_3(%arg0: i32) -> (i32, i32) {
    %c0_i32 = arith.constant 0 : i32
    %c0_i32_0 = arith.constant 0 : i32
    return %arg0, %c0_i32 : i32, i32
  }
  func.func @transform_4(%arg0: i32) -> (i32, i32) {
    %c0_i32 = arith.constant 0 : i32
    %c0_i32_0 = arith.constant 0 : i32
    return %c0_i32, %arg0 : i32, i32
  }
  func.func @transform_5(%arg0: i32) -> (i32, i32) {
    %c0_i32 = arith.constant 0 : i32
    %c0_i32_0 = arith.constant 0 : i32
    return %arg0, %c0_i32 : i32, i32
  }
}

</mosaic_0001>

<llo_original>
// kernel: tpu_custom_call.1
$region0: #{tpu_custom_call.1}
  #allocation0 [shape = 'u32[]', space=smem, size = 0x4, offset = 0x4, fixed_abs, tag = 'smem constant byte address 0x4 - core index']
  #allocation1 [shape = 'u32[144,128]{1,0:T(1,128)}', space=vmem, size = 0x12000, scoped, tag = 'internal scratch']
  %s0 = inlined_call_operand.vmem [shape: f32[384,16], index: 0, kind: input, shape index: {}]
  %s1 = inlined_call_operand.vmem [shape: f32[16,32], index: 1, kind: input, shape index: {}]
  %s2 = inlined_call_operand.vmem [shape: f32[32,8], index: 2, kind: input, shape index: {}]
  %s3 = inlined_call_operand.vmem [shape: bf16[384,64], index: 3, kind: output, shape index: {0}]
  %s4 = inlined_call_operand.hbm [shape: f32[4,384], index: 4, kind: output, shape index: {1}]
  %s5 = inlined_call_operand.vmem [shape: f32[384,4], index: 5, kind: output, shape index: {2}]
  %6 = xla_tuple %s3, %s4, %s5
  %s7 = sld [smem:[#allocation0]]
  $region61: #{tpu_custom_call.1} parent=0
    _
  %s9 = ssub.s32 1, %s7
  %s10 = scalar_select 0, %s9, %s7
  $region1: #{tpu_custom_call.1} parent=0
    #allocation2 [shape = 'u8[4096]{0}', space=vmem, size = 0x1000, scoped, tag = 'output window, operand 1']
    #allocation3 [shape = 's32[2]{0}', space=sflag, size = 0x8, scoped, tag = 'scoped memory for tpu_custom_call.1']
    %11 = vsyncpa [#allocation3], 0
    %s12 = scalar_lea.sflag [#allocation3], 1
    %13 = vsyncpa %s12, 0
    loop: start=0, step=1, limit=5
    $region2: #{tpu_custom_call.1} parent=1 // loop_pre_header
      _
    $region3: #{tpu_custom_call.1} parent=1 // loop_header
      %s15 = sphi 0, %s19
      %p16 = scmp.ge.s32.totalorder %s15, 5
      %s25 = sphi 0, %s27
      %s28 = sphi 0, %s25
      %s29 = sphi 0, %s28
      %s45 = sphi 0, %s29
      %s49 = sphi 0, %s49
      %s51 = sphi 0, %s49
      %s52 = sphi 0, %s51
      %s66 = sphi 0, %s52
      %s70 = sphi 0, %s70
      %s72 = sphi 0, %s70
      %s73 = sphi 0, %s72
      %s87 = sphi 0, %s73
      %s93 = sphi 0, %s95
      %s96 = sphi 0, %s93
      %s97 = sphi 0, %s96
      %s113 = sphi 0, %s97
      %s119 = sphi 0, %s121
      %s122 = sphi 0, %s119
      %s123 = sphi 0, %s122
      %s139 = sphi 0, %s123
      %s145 = sphi 0, %s147
      %s148 = sphi 0, %s145
      %s149 = sphi 0, %s148
      %s165 = sphi 0, %s149
    $region4: #{tpu_custom_call.1} parent=1 // loop_header_branch
      %18 = sbr.rel (%p16) target = $region8
    $region5: #{tpu_custom_call.1} parent=1 // loop_body
      %s20 = ssub.s32 %s15, 1
      %s21 = ssub.s32 %s15, 2
      %s22 = sadd.s32 %s15, 1
      %s23 = ssub.s32 %s15, %s22
      %p24 = scmp.eq.s32.totalorder %s23, 0
      %s26 = sadd.s32 %s25, 1
      %s27 = scalar_select %p24, %s25, %s26
      %p30 = pneg %p24
      %p31 = scmp.eq.s32.totalorder %s15, 2
      %p32 = por %p30, %p31
      %p33 = scmp.ne.s32.totalorder %s25, %s28
      %p34 = scmp.eq.s32.totalorder %s15, 0
      %p35 = por %p33, %p34
      %p36 = scmp.ne.s32.totalorder %s25, %s28
      %p37 = scmp.eq.s32.totalorder %s20, 2
      %p38 = por %p36, %p37
      %p39 = scmp.ne.s32.totalorder %s28, %s29
      %p40 = scmp.eq.s32.totalorder %s20, 0
      %p41 = por %p39, %p40
      %p42 = scmp.ne.s32.totalorder %s28, %s29
      %p43 = scmp.eq.s32.totalorder %s21, 2
      %p44 = por %p42, %p43
      %p46 = scmp.ne.s32.totalorder %s29, %s45
      %p47 = scmp.eq.s32.totalorder %s21, 0
      %p48 = por %p46, %p47
      %s50 = sadd.s32 %s49, 1
      %p53 = scmp.eq.s32.totalorder %s15, 2
      %p54 = scmp.ne.s32.totalorder %s49, %s51
      %p55 = scmp.eq.s32.totalorder %s15, 0
      %p56 = por %p54, %p55
      %p57 = scmp.ne.s32.totalorder %s49, %s51
      %p58 = scmp.eq.s32.totalorder %s20, 2
      %p59 = por %p57, %p58
      %p60 = scmp.ne.s32.totalorder %s51, %s52
      %p61 = scmp.eq.s32.totalorder %s20, 0
      %p62 = por %p60, %p61
      %p63 = scmp.ne.s32.totalorder %s51, %s52
      %p64 = scmp.eq.s32.totalorder %s21, 2
      %p65 = por %p63, %p64
      %p67 = scmp.ne.s32.totalorder %s52, %s66
      %p68 = scmp.eq.s32.totalorder %s21, 0
      %p69 = por %p67, %p68
      %s71 = sadd.s32 %s70, 1
      %p74 = scmp.eq.s32.totalorder %s15, 2
      %p75 = scmp.ne.s32.totalorder %s70, %s72
      %p76 = scmp.eq.s32.totalorder %s15, 0
      %p77 = por %p75, %p76
      %p78 = scmp.ne.s32.totalorder %s70, %s72
      %p79 = scmp.eq.s32.totalorder %s20, 2
      %p80 = por %p78, %p79
      %p81 = scmp.ne.s32.totalorder %s72, %s73
      %p82 = scmp.eq.s32.totalorder %s20, 0
      %p83 = por %p81, %p82
      %p84 = scmp.ne.s32.totalorder %s72, %s73
      %p85 = scmp.eq.s32.totalorder %s21, 2
      %p86 = por %p84, %p85
      %p88 = scmp.ne.s32.totalorder %s73, %s87
      %p89 = scmp.eq.s32.totalorder %s21, 0
      %p90 = por %p88, %p89
      %s91 = ssub.s32 %s15, %s22
      %p92 = scmp.eq.s32.totalorder %s91, 0
      %s94 = sadd.s32 %s93, 1
      %s95 = scalar_select %p92, %s93, %s94
      %p98 = pneg %p92
      %p99 = scmp.eq.s32.totalorder %s15, 2
      %p100 = por %p98, %p99
      %p101 = scmp.ne.s32.totalorder %s93, %s96
      %p102 = scmp.eq.s32.totalorder %s15, 0
      %p103 = por %p101, %p102
      %p104 = scmp.ne.s32.totalorder %s93, %s96
      %p105 = scmp.eq.s32.totalorder %s20, 2
      %p106 = por %p104, %p105
      %p107 = scmp.ne.s32.totalorder %s96, %s97
      %p108 = scmp.eq.s32.totalorder %s20, 0
      %p109 = por %p107, %p108
      %p110 = scmp.ne.s32.totalorder %s96, %s97
      %p111 = scmp.eq.s32.totalorder %s21, 2
      %p112 = por %p110, %p111
      %p114 = scmp.ne.s32.totalorder %s97, %s113
      %p115 = scmp.eq.s32.totalorder %s21, 0
      %p116 = por %p114, %p115
      %s117 = ssub.s32 %s15, %s22
      %p118 = scmp.eq.s32.totalorder %s117, 0
      %s120 = sadd.s32 %s119, 1
      %s121 = scalar_select %p118, %s119, %s120
      %p124 = pneg %p118
      %p125 = scmp.eq.s32.totalorder %s15, 2
      %p126 = por %p124, %p125
      %p127 = scmp.ne.s32.totalorder %s119, %s122
      %p128 = scmp.eq.s32.totalorder %s15, 0
      %p129 = por %p127, %p128
      %p130 = scmp.ne.s32.totalorder %s119, %s122
      %p131 = scmp.eq.s32.totalorder %s20, 2
      %p132 = por %p130, %p131
      %p133 = scmp.ne.s32.totalorder %s122, %s123
      %p134 = scmp.eq.s32.totalorder %s20, 0
      %p135 = por %p133, %p134
      %p136 = scmp.ne.s32.totalorder %s122, %s123
      %p137 = scmp.eq.s32.totalorder %s21, 2
      %p138 = por %p136, %p137
      %p140 = scmp.ne.s32.totalorder %s123, %s139
      %p141 = scmp.eq.s32.totalorder %s21, 0
      %p142 = por %p140, %p141
      %s143 = ssub.s32 %s15, %s22
      %p144 = scmp.eq.s32.totalorder %s143, 0
      %s146 = sadd.s32 %s145, 1
      %s147 = scalar_select %p144, %s145, %s146
      %p150 = pneg %p144
      %p151 = scmp.eq.s32.totalorder %s15, 2
      %p152 = por %p150, %p151
      %p153 = scmp.ne.s32.totalorder %s145, %s148
      %p154 = scmp.eq.s32.totalorder %s15, 0
      %p155 = por %p153, %p154
      %p156 = scmp.ne.s32.totalorder %s145, %s148
      %p157 = scmp.eq.s32.totalorder %s20, 2
      %p158 = por %p156, %p157
      %p159 = scmp.ne.s32.totalorder %s148, %s149
      %p160 = scmp.eq.s32.totalorder %s20, 0
      %p161 = por %p159, %p160
      %p162 = scmp.ne.s32.totalorder %s148, %s149
      %p163 = scmp.eq.s32.totalorder %s21, 2
      %p164 = por %p162, %p163
      %p166 = scmp.ne.s32.totalorder %s149, %s165
      %p167 = scmp.eq.s32.totalorder %s21, 0
      %p168 = por %p166, %p167
      %p169 = scmp.le.s32.totalorder 1, %s15
      %p170 = scmp.lt.s32.totalorder %s15, 4
      %p171 = pnand %p169, %p170
      %p172 = pneg %p171
      // Predicated region
      $region9: #{tpu_custom_call.1} parent=5 // pred_check
        _
      $region10: #{tpu_custom_call.1} parent=5 // pred_check_branch
        %174 = sbr.rel (%p171) target = $region12
      $region11: #{tpu_custom_call.1} parent=5 // pred_region
        %s175 = ssub.s32 %s15, 1
        // Predicated region
        $region13: #{tpu_custom_call.1} parent=11 // pred_check
          %p176 = pneg %p62
        $region14: #{tpu_custom_call.1} parent=11 // pred_check_branch
          %178 = sbr.rel (%p176) target = $region16
        $region15: #{tpu_custom_call.1} parent=11 // pred_region
          _
        $region16: #{tpu_custom_call.1} parent=11 // pred_fallthru
          _
        // Predicated region
        $region17: #{tpu_custom_call.1} parent=11 // pred_check
          %p179 = pneg %p83
        $region18: #{tpu_custom_call.1} parent=11 // pred_check_branch
          %181 = sbr.rel (%p179) target = $region20
        $region19: #{tpu_custom_call.1} parent=11 // pred_region
          _
        $region20: #{tpu_custom_call.1} parent=11 // pred_fallthru
          _
      $region12: #{tpu_custom_call.1} parent=5 // pred_fallthru
        _
      %p182 = scmp.lt.s32.totalorder %s15, 3
      // Predicated region
      $region21: #{tpu_custom_call.1} parent=5 // pred_check
        %p183 = pneg %p182
      $region22: #{tpu_custom_call.1} parent=5 // pred_check_branch
        %185 = sbr.rel (%p183) target = $region24
      $region23: #{tpu_custom_call.1} parent=5 // pred_region
        // Predicated region
        $region25: #{tpu_custom_call.1} parent=23 // pred_check
          %p186 = pneg %p35
        $region26: #{tpu_custom_call.1} parent=23 // pred_check_branch
          %188 = sbr.rel (%p186) target = $region28
        $region27: #{tpu_custom_call.1} parent=23 // pred_region
          %s189 = smul.u32 16, %s15
          %p190 = scmp.lt.s32.totalorder %s189, 47
          %s191 = scalar_select %p190, %s189, 47
          %s192 = smul.addr %s191, 8
          %s193 = scalar_lea.vmem %s0, %s192
          %s194 = smul.u32 16, %s15
        $region28: #{tpu_custom_call.1} parent=23 // pred_fallthru
          _
      $region24: #{tpu_custom_call.1} parent=5 // pred_fallthru
        _
      %p195 = scmp.le.s32.totalorder 1, %s15
      %p196 = scmp.lt.s32.totalorder %s15, 4
      %p197 = pnand %p195, %p196
      %p198 = pneg %p197
      // Predicated region
      $region29: #{tpu_custom_call.1} parent=5 // pred_check
        _
      $region30: #{tpu_custom_call.1} parent=5 // pred_check_branch
        %200 = sbr.rel (%p197) target = $region32
      $region31: #{tpu_custom_call.1} parent=5 // pred_region
        %s201 = ssub.s32 %s15, 1
        %s202 = smul.u32 16, %s20
        %p203 = scmp.lt.s32.totalorder %s202, 47
        %s204 = scalar_select %p203, %s202, 47
        %s205 = smul.addr %s204, 8
        %s206 = scalar_lea.vmem %s0, %s205
        %p207 = pneg %p41
        %p208 = pneg %p38
        %p209 = pneg %p62
        %p210 = pneg %p59
        %p211 = pneg %p83
        %p212 = pneg %p80
        %p213 = pneg %p109
        %p214 = pneg %p106
        %s215 = smul.u32 16, %s20
        %p216 = scmp.lt.s32.totalorder %s215, 47
        %s217 = scalar_select %p216, %s215, 47
        %s218 = smul.addr %s217, 4
        %s219 = scalar_lea.vmem %s3, %s218
        %p220 = pneg %p135
        %p221 = pneg %p132
        %s222 = sand.u32 %s122, 1
        %s223 = scalar_lea.sflag [#allocation3], %s222
        %s224 = sand.u32 %s122, 1
        %s225 = smul.addr %s224, 4
        %s226 = scalar_lea.vmem [#allocation2], %s225
        %p227 = pneg %p161
        %p228 = pneg %p158
        %s229 = smul.u32 16, %s20
        %p230 = scmp.lt.s32.totalorder %s229, 47
        %s231 = scalar_select %p230, %s229, 47
        %s232 = smul.addr %s231, 8
        %s233 = scalar_lea.vmem %s5, %s232
        %s234 = smul.u32 16, %s20
        %p235 = scmp.lt.s32.totalorder %s234, 47
        %s236 = scalar_select %p235, %s234, 47
        %s237 = smul.addr %s236, 8
        %s238 = scalar_lea.vmem %s0, %s237
        %s239 = smul.u32 16, %s20
        %s240 = smul.u32 16, %s20
        %p241 = scmp.lt.s32.totalorder %s240, 47
        %s242 = scalar_select %p241, %s240, 47
        %s243 = smul.addr %s242, 4
        %s244 = scalar_lea.vmem %s3, %s243
        %s245 = smul.u32 16, %s20
        %s246 = smul.u32 16, %s20
        %p247 = scmp.lt.s32.totalorder %s246, 47
        %s248 = scalar_select %p247, %s246, 47
        %s249 = smul.addr %s248, 8
        %s250 = scalar_lea.vmem %s5, %s249
        %s251 = smul.u32 16, %s20
        %v252 = vld [vmem:[%s238] sm:$0xff]
        %v253 = vld [vmem:[%s238 + $0x8] sm:$0xff]
        %v254 = vld [vmem:[%s238 + $0x10] sm:$0xff]
        %v255 = vld [vmem:[%s238 + $0x18] sm:$0xff]
        %v256 = vld [vmem:[%s238 + $0x20] sm:$0xff]
        %v257 = vld [vmem:[%s238 + $0x28] sm:$0xff]
        %v258 = vld [vmem:[%s238 + $0x30] sm:$0xff]
        %v259 = vld [vmem:[%s238 + $0x38] sm:$0xff]
        %v260 = vld [vmem:[%s238 + $0x40] sm:$0xff]
        %v261 = vld [vmem:[%s238 + $0x48] sm:$0xff]
        %v262 = vld [vmem:[%s238 + $0x50] sm:$0xff]
        %v263 = vld [vmem:[%s238 + $0x58] sm:$0xff]
        %v264 = vld [vmem:[%s238 + $0x60] sm:$0xff]
        %v265 = vld [vmem:[%s238 + $0x68] sm:$0xff]
        %v266 = vld [vmem:[%s238 + $0x70] sm:$0xff]
        %v267 = vld [vmem:[%s238 + $0x78] sm:$0xff]
        %v268 = vld [vmem:[%s1] sm:$0xff]
        %v269 = vld [vmem:[%s1 + $0x8] sm:$0xff]
        %vm270 = vcmask 130048
        %v272 = vsel %vm270, %v252, 0
        %v275 = vsel %vm270, %v253, 0
        %v278 = vsel %vm270, %v254, 0
        %v281 = vsel %vm270, %v255, 0
        %v284 = vsel %vm270, %v256, 0
        %v287 = vsel %vm270, %v257, 0
        %v290 = vsel %vm270, %v258, 0
        %v293 = vsel %vm270, %v259, 0
        %v296 = vsel %vm270, %v260, 0
        %v299 = vsel %vm270, %v261, 0
        %v302 = vsel %vm270, %v262, 0
        %v305 = vsel %vm270, %v263, 0
        %v308 = vsel %vm270, %v264, 0
        %v311 = vsel %vm270, %v265, 0
        %v314 = vsel %vm270, %v266, 0
        %v317 = vsel %vm270, %v267, 0
        %319 = vmatprep.subr.mxu0 0.0
        %320 = vmatpush1.msra.mxu0 %v268
        %321 = vmatprep.subr.mxu0 0.0
        %322 = vmatpush1.msra.mxu0 %v269
        %323 = vmatprep.subr.mxu0 0.0
        %324 = vmatpush1.msra.mxu0 0.0
        %325 = vmatprep.subr.mxu0 0.0
        %326 = vmatpush1.msra.mxu0 0.0
        %327 = vmatprep.subr.mxu0 0.0
        %328 = vmatpush1.msra.mxu0 0.0
        %329 = vmatprep.subr.mxu0 0.0
        %330 = vmatpush1.msra.mxu0 0.0
        %331 = vmatprep.subr.mxu0 0.0
        %332 = vmatpush1.msra.mxu0 0.0
        %333 = vmatprep.subr.mxu0 0.0
        %334 = vmatpush1.msra.mxu0 0.0
        %335 = vmatprep.subr.mxu0 0.0
        %336 = vmatpush1.msra.mxu0 0.0
        %337 = vmatprep.subr.mxu0 0.0
        %338 = vmatpush1.msra.mxu0 0.0
        %339 = vmatprep.subr.mxu0 0.0
        %340 = vmatpush1.msra.mxu0 0.0
        %341 = vmatprep.subr.mxu0 0.0
        %342 = vmatpush1.msra.mxu0 0.0
        %343 = vmatprep.subr.mxu0 0.0
        %344 = vmatpush1.msra.mxu0 0.0
        %345 = vmatprep.subr.mxu0 0.0
        %346 = vmatpush1.msra.mxu0 0.0
        %347 = vmatprep.subr.mxu0 0.0
        %348 = vmatpush1.msra.mxu0 0.0
        %349 = vmatprep.subr.mxu0 0.0
        %350 = vmatpush1.msra.mxu0 0.0
        %351 = vmatprep.subr.mxu0 0.0
        %352 = vmatpush1.msra.mxu0 0.0
        %353 = vmatprep.subr.mxu0 0.0
        %354 = vmatpush1.msra.mxu0 0.0
        %355 = vmatprep.subr.mxu0 0.0
        %356 = vmatpush1.msra.mxu0 0.0
        %357 = vmatprep.subr.mxu0 0.0
        %358 = vmatpush1.msra.mxu0 0.0
        %359 = vmatprep.subr.mxu0 0.0
        %360 = vmatpush1.msra.mxu0 0.0
        %361 = vmatprep.subr.mxu0 0.0
        %362 = vmatpush1.msra.mxu0 0.0
        %363 = vmatprep.subr.mxu0 0.0
        %364 = vmatpush1.msra.mxu0 0.0
        %365 = vmatprep.subr.mxu0 0.0
        %366 = vmatpush1.msra.mxu0 0.0
        %367 = vmatprep.subr.mxu0 0.0
        %368 = vmatpush1.msra.mxu0 0.0
        %369 = vmatprep.subr.mxu0 0.0
        %370 = vmatpush1.msra.mxu0 0.0
        %371 = vmatprep.subr.mxu0 0.0
        %372 = vmatpush1.msra.mxu0 0.0
        %373 = vmatprep.subr.mxu0 0.0
        %374 = vmatpush1.msra.mxu0 0.0
        %375 = vmatprep.subr.mxu0 0.0
        %376 = vmatpush1.msra.mxu0 0.0
        %377 = vmatprep.subr.mxu0 0.0
        %378 = vmatpush1.msra.mxu0 0.0
        %379 = vmatprep.subr.mxu0 0.0
        %380 = vmatpush1.msra.mxu0 0.0
        %381 = vmatprep.subr.mxu0 0.0
        %382 = vmatpush1.msra.mxu0 0.0
        %383 = vmatprep.mubr.f32.mxu0 0.0
        %384 = vmatmul.mubr.f32.gmra.mrb[0].mxu0 %v272
        %v385 = vpop.f32.mrb[0].mxu0
        %v386 = vadd.f32 0.0, %v385
        %v387 = vpop.f32.mrb[0].mxu0
        %388 = vmatprep.mubr.f32.mxu0 0.0
        %389 = vmatmul.mubr.f32.gmra.mrb[0].mxu0 %v275
        %v390 = vpop.f32.mrb[0].mxu0
        %v391 = vadd.f32 0.0, %v390
        %v392 = vpop.f32.mrb[0].mxu0
        %393 = vmatprep.mubr.f32.mxu0 0.0
        %394 = vmatmul.mubr.f32.gmra.mrb[0].mxu0 %v278
        %v395 = vpop.f32.mrb[0].mxu0
        %v396 = vadd.f32 0.0, %v395
        %v397 = vpop.f32.mrb[0].mxu0
        %398 = vmatprep.mubr.f32.mxu0 0.0
        %399 = vmatmul.mubr.f32.gmra.mrb[0].mxu0 %v281
        %v400 = vpop.f32.mrb[0].mxu0
        %v401 = vadd.f32 0.0, %v400
        %v402 = vpop.f32.mrb[0].mxu0
        %403 = vmatprep.mubr.f32.mxu0 0.0
        %404 = vmatmul.mubr.f32.gmra.mrb[0].mxu0 %v284
        %v405 = vpop.f32.mrb[0].mxu0
        %v406 = vadd.f32 0.0, %v405
        %v407 = vpop.f32.mrb[0].mxu0
        %408 = vmatprep.mubr.f32.mxu0 0.0
        %409 = vmatmul.mubr.f32.gmra.mrb[0].mxu0 %v287
        %v410 = vpop.f32.mrb[0].mxu0
        %v411 = vadd.f32 0.0, %v410
        %v412 = vpop.f32.mrb[0].mxu0
        %413 = vmatprep.mubr.f32.mxu0 0.0
        %414 = vmatmul.mubr.f32.gmra.mrb[0].mxu0 %v290
        %v415 = vpop.f32.mrb[0].mxu0
        %v416 = vadd.f32 0.0, %v415
        %v417 = vpop.f32.mrb[0].mxu0
        %418 = vmatprep.mubr.f32.mxu0 0.0
        %419 = vmatmul.mubr.f32.gmra.mrb[0].mxu0 %v293
        %v420 = vpop.f32.mrb[0].mxu0
        %v421 = vadd.f32 0.0, %v420
        %v422 = vpop.f32.mrb[0].mxu0
        %423 = vmatprep.mubr.f32.mxu0 0.0
        %424 = vmatmul.mubr.f32.gmra.mrb[0].mxu0 %v296
        %v425 = vpop.f32.mrb[0].mxu0
        %v426 = vadd.f32 0.0, %v425
        %v427 = vpop.f32.mrb[0].mxu0
        %428 = vmatprep.mubr.f32.mxu0 0.0
        %429 = vmatmul.mubr.f32.gmra.mrb[0].mxu0 %v299
        %v430 = vpop.f32.mrb[0].mxu0
        %v431 = vadd.f32 0.0, %v430
        %v432 = vpop.f32.mrb[0].mxu0
        %433 = vmatprep.mubr.f32.mxu0 0.0
        %434 = vmatmul.mubr.f32.gmra.mrb[0].mxu0 %v302
        %v435 = vpop.f32.mrb[0].mxu0
        %v436 = vadd.f32 0.0, %v435
        %v437 = vpop.f32.mrb[0].mxu0
        %438 = vmatprep.mubr.f32.mxu0 0.0
        %439 = vmatmul.mubr.f32.gmra.mrb[0].mxu0 %v305
        %v440 = vpop.f32.mrb[0].mxu0
        %v441 = vadd.f32 0.0, %v440
        %v442 = vpop.f32.mrb[0].mxu0
        %443 = vmatprep.mubr.f32.mxu0 0.0
        %444 = vmatmul.mubr.f32.gmra.mrb[0].mxu0 %v308
        %v445 = vpop.f32.mrb[0].mxu0
        %v446 = vadd.f32 0.0, %v445
        %v447 = vpop.f32.mrb[0].mxu0
        %448 = vmatprep.mubr.f32.mxu0 0.0
        %449 = vmatmul.mubr.f32.gmra.mrb[0].mxu0 %v311
        %v450 = vpop.f32.mrb[0].mxu0
        %v451 = vadd.f32 0.0, %v450
        %v452 = vpop.f32.mrb[0].mxu0
        %453 = vmatprep.mubr.f32.mxu0 0.0
        %454 = vmatmul.mubr.f32.gmra.mrb[0].mxu0 %v314
        %v455 = vpop.f32.mrb[0].mxu0
        %v456 = vadd.f32 0.0, %v455
        %v457 = vpop.f32.mrb[0].mxu0
        %458 = vmatprep.mubr.f32.mxu0 0.0
        %459 = vmatmul.mubr.f32.gmra.mrb[0].mxu0 %v317
        %v460 = vpop.f32.mrb[0].mxu0
        %v461 = vadd.f32 0.0, %v460
        %v462 = vpop.f32.mrb[0].mxu0
        %463 = vdwg.mxu0
        %v464 = vld [vmem:[%s2] sm:$0xff]
        %v465 = vld [vmem:[%s2 + $0x8] sm:$0xff]
        %v466 = vld [vmem:[%s2 + $0x10] sm:$0xff]
        %v467 = vld [vmem:[%s2 + $0x18] sm:$0xff]
        %vm468 = vcmask 261120
        %v470 = vsel %vm468, %v386, 0
        %v473 = vsel %vm468, %v391, 0
        %v476 = vsel %vm468, %v396, 0
        %v479 = vsel %vm468, %v401, 0
        %v482 = vsel %vm468, %v406, 0
        %v485 = vsel %vm468, %v411, 0
        %v488 = vsel %vm468, %v416, 0
        %v491 = vsel %vm468, %v421, 0
        %v494 = vsel %vm468, %v426, 0
        %v497 = vsel %vm468, %v431, 0
        %v500 = vsel %vm468, %v436, 0
        %v503 = vsel %vm468, %v441, 0
        %v506 = vsel %vm468, %v446, 0
        %v509 = vsel %vm468, %v451, 0
        %v512 = vsel %vm468, %v456, 0
        %v515 = vsel %vm468, %v461, 0
        %517 = vmatprep.subr.mxu0 0.0
        %518 = vmatpush1.msra.mxu0 %v464
        %519 = vmatprep.subr.mxu0 0.0
        %520 = vmatpush1.msra.mxu0 %v465
        %521 = vmatprep.subr.mxu0 0.0
        %522 = vmatpush1.msra.mxu0 %v466
        %523 = vmatprep.subr.mxu0 0.0
        %524 = vmatpush1.msra.mxu0 %v467
        %525 = vmatprep.subr.mxu0 0.0
        %526 = vmatpush1.msra.mxu0 0.0
        %527 = vmatprep.subr.mxu0 0.0
        %528 = vmatpush1.msra.mxu0 0.0
        %529 = vmatprep.subr.mxu0 0.0
        %530 = vmatpush1.msra.mxu0 0.0
        %531 = vmatprep.subr.mxu0 0.0
        %532 = vmatpush1.msra.mxu0 0.0
        %533 = vmatprep.subr.mxu0 0.0
        %534 = vmatpush1.msra.mxu0 0.0
        %535 = vmatprep.subr.mxu0 0.0
        %536 = vmatpush1.msra.mxu0 0.0
        %537 = vmatprep.subr.mxu0 0.0
        %538 = vmatpush1.msra.mxu0 0.0
        %539 = vmatprep.subr.mxu0 0.0
        %540 = vmatpush1.msra.mxu0 0.0
        %541 = vmatprep.subr.mxu0 0.0
        %542 = vmatpush1.msra.mxu0 0.0
        %543 = vmatprep.subr.mxu0 0.0
        %544 = vmatpush1.msra.mxu0 0.0
        %545 = vmatprep.subr.mxu0 0.0
        %546 = vmatpush1.msra.mxu0 0.0
        %547 = vmatprep.subr.mxu0 0.0
        %548 = vmatpush1.msra.mxu0 0.0
        %549 = vmatprep.subr.mxu0 0.0
        %550 = vmatpush1.msra.mxu0 0.0
        %551 = vmatprep.subr.mxu0 0.0
        %552 = vmatpush1.msra.mxu0 0.0
        %553 = vmatprep.subr.mxu0 0.0
        %554 = vmatpush1.msra.mxu0 0.0
        %555 = vmatprep.subr.mxu0 0.0
        %556 = vmatpush1.msra.mxu0 0.0
        %557 = vmatprep.subr.mxu0 0.0
        %558 = vmatpush1.msra.mxu0 0.0
        %559 = vmatprep.subr.mxu0 0.0
        %560 = vmatpush1.msra.mxu0 0.0
        %561 = vmatprep.subr.mxu0 0.0
        %562 = vmatpush1.msra.mxu0 0.0
        %563 = vmatprep.subr.mxu0 0.0
        %564 = vmatpush1.msra.mxu0 0.0
        %565 = vmatprep.subr.mxu0 0.0
        %566 = vmatpush1.msra.mxu0 0.0
        %567 = vmatprep.subr.mxu0 0.0
        %568 = vmatpush1.msra.mxu0 0.0
        %569 = vmatprep.subr.mxu0 0.0
        %570 = vmatpush1.msra.mxu0 0.0
        %571 = vmatprep.subr.mxu0 0.0
        %572 = vmatpush1.msra.mxu0 0.0
        %573 = vmatprep.subr.mxu0 0.0
        %574 = vmatpush1.msra.mxu0 0.0
        %575 = vmatprep.subr.mxu0 0.0
        %576 = vmatpush1.msra.mxu0 0.0
        %577 = vmatprep.subr.mxu0 0.0
        %578 = vmatpush1.msra.mxu0 0.0
        %579 = vmatprep.subr.mxu0 0.0
        %580 = vmatpush1.msra.mxu0 0.0
        %581 = vmatprep.mubr.f32.mxu0 0.0
        %582 = vmatmul.mubr.f32.gmra.mrb[0].mxu0 %v470
        %v583 = vpop.f32.mrb[0].mxu0
        %v584 = vadd.f32 0.0, %v583
        %v585 = vpop.f32.mrb[0].mxu0
        %586 = vmatprep.mubr.f32.mxu0 0.0
        %587 = vmatmul.mubr.f32.gmra.mrb[0].mxu0 %v473
        %v588 = vpop.f32.mrb[0].mxu0
        %v589 = vadd.f32 0.0, %v588
        %v590 = vpop.f32.mrb[0].mxu0
        %591 = vmatprep.mubr.f32.mxu0 0.0
        %592 = vmatmul.mubr.f32.gmra.mrb[0].mxu0 %v476
        %v593 = vpop.f32.mrb[0].mxu0
        %v594 = vadd.f32 0.0, %v593
        %v595 = vpop.f32.mrb[0].mxu0
        %596 = vmatprep.mubr.f32.mxu0 0.0
        %597 = vmatmul.mubr.f32.gmra.mrb[0].mxu0 %v479
        %v598 = vpop.f32.mrb[0].mxu0
        %v599 = vadd.f32 0.0, %v598
        %v600 = vpop.f32.mrb[0].mxu0
        %601 = vmatprep.mubr.f32.mxu0 0.0
        %602 = vmatmul.mubr.f32.gmra.mrb[0].mxu0 %v482
        %v603 = vpop.f32.mrb[0].mxu0
        %v604 = vadd.f32 0.0, %v603
        %v605 = vpop.f32.mrb[0].mxu0
        %606 = vmatprep.mubr.f32.mxu0 0.0
        %607 = vmatmul.mubr.f32.gmra.mrb[0].mxu0 %v485
        %v608 = vpop.f32.mrb[0].mxu0
        %v609 = vadd.f32 0.0, %v608
        %v610 = vpop.f32.mrb[0].mxu0
        %611 = vmatprep.mubr.f32.mxu0 0.0
        %612 = vmatmul.mubr.f32.gmra.mrb[0].mxu0 %v488
        %v613 = vpop.f32.mrb[0].mxu0
        %v614 = vadd.f32 0.0, %v613
        %v615 = vpop.f32.mrb[0].mxu0
        %616 = vmatprep.mubr.f32.mxu0 0.0
        %617 = vmatmul.mubr.f32.gmra.mrb[0].mxu0 %v491
        %v618 = vpop.f32.mrb[0].mxu0
        %v619 = vadd.f32 0.0, %v618
        %v620 = vpop.f32.mrb[0].mxu0
        %621 = vmatprep.mubr.f32.mxu0 0.0
        %622 = vmatmul.mubr.f32.gmra.mrb[0].mxu0 %v494
        %v623 = vpop.f32.mrb[0].mxu0
        %v624 = vadd.f32 0.0, %v623
        %v625 = vpop.f32.mrb[0].mxu0
        %626 = vmatprep.mubr.f32.mxu0 0.0
        %627 = vmatmul.mubr.f32.gmra.mrb[0].mxu0 %v497
        %v628 = vpop.f32.mrb[0].mxu0
        %v629 = vadd.f32 0.0, %v628
        %v630 = vpop.f32.mrb[0].mxu0
        %631 = vmatprep.mubr.f32.mxu0 0.0
        %632 = vmatmul.mubr.f32.gmra.mrb[0].mxu0 %v500
        %v633 = vpop.f32.mrb[0].mxu0
        %v634 = vadd.f32 0.0, %v633
        %v635 = vpop.f32.mrb[0].mxu0
        %636 = vmatprep.mubr.f32.mxu0 0.0
        %637 = vmatmul.mubr.f32.gmra.mrb[0].mxu0 %v503
        %v638 = vpop.f32.mrb[0].mxu0
        %v639 = vadd.f32 0.0, %v638
        %v640 = vpop.f32.mrb[0].mxu0
        %641 = vmatprep.mubr.f32.mxu0 0.0
        %642 = vmatmul.mubr.f32.gmra.mrb[0].mxu0 %v506
        %v643 = vpop.f32.mrb[0].mxu0
        %v644 = vadd.f32 0.0, %v643
        %v645 = vpop.f32.mrb[0].mxu0
        %646 = vmatprep.mubr.f32.mxu0 0.0
        %647 = vmatmul.mubr.f32.gmra.mrb[0].mxu0 %v509
        %v648 = vpop.f32.mrb[0].mxu0
        %v649 = vadd.f32 0.0, %v648
        %v650 = vpop.f32.mrb[0].mxu0
        %651 = vmatprep.mubr.f32.mxu0 0.0
        %652 = vmatmul.mubr.f32.gmra.mrb[0].mxu0 %v512
        %v653 = vpop.f32.mrb[0].mxu0
        %v654 = vadd.f32 0.0, %v653
        %v655 = vpop.f32.mrb[0].mxu0
        %656 = vmatprep.mubr.f32.mxu0 0.0
        %657 = vmatmul.mubr.f32.gmra.mrb[0].mxu0 %v515
        %v658 = vpop.f32.mrb[0].mxu0
        %v659 = vadd.f32 0.0, %v658
        %v660 = vpop.f32.mrb[0].mxu0
        %661 = vdwg.mxu0
        %678 = vrot.lane.b32.xlu0 %v584, 124
        %v679 = vpop.permute.xlu0 %678
        %680 = vrot.lane.b32.xlu0 %v589, 124
        %v681 = vpop.permute.xlu0 %680
        %682 = vrot.lane.b32.xlu0 %v594, 124
        %v683 = vpop.permute.xlu0 %682
        %684 = vrot.lane.b32.xlu0 %v599, 124
        %v685 = vpop.permute.xlu0 %684
        %686 = vrot.lane.b32.xlu0 %v604, 124
        %v687 = vpop.permute.xlu0 %686
        %688 = vrot.lane.b32.xlu0 %v609, 124
        %v689 = vpop.permute.xlu0 %688
        %690 = vrot.lane.b32.xlu0 %v614, 124
        %v691 = vpop.permute.xlu0 %690
        %692 = vrot.lane.b32.xlu0 %v619, 124
        %v693 = vpop.permute.xlu0 %692
        %694 = vrot.lane.b32.xlu0 %v624, 124
        %v695 = vpop.permute.xlu0 %694
        %696 = vrot.lane.b32.xlu0 %v629, 124
        %v697 = vpop.permute.xlu0 %696
        %698 = vrot.lane.b32.xlu0 %v634, 124
        %v699 = vpop.permute.xlu0 %698
        %700 = vrot.lane.b32.xlu0 %v639, 124
        %v701 = vpop.permute.xlu0 %700
        %702 = vrot.lane.b32.xlu0 %v644, 124
        %v703 = vpop.permute.xlu0 %702
        %704 = vrot.lane.b32.xlu0 %v649, 124
        %v705 = vpop.permute.xlu0 %704
        %706 = vrot.lane.b32.xlu0 %v654, 124
        %v707 = vpop.permute.xlu0 %706
        %708 = vrot.lane.b32.xlu0 %v659, 124
        %v709 = vpop.permute.xlu0 %708
        %vm726 = vcmask 31744
        %727 = vst.msk [vmem:[%s250] sm:$0xff] %vm726, %v679
        %728 = vst.msk [vmem:[%s250 + $0x8] sm:$0xff] %vm726, %v681
        %729 = vst.msk [vmem:[%s250 + $0x10] sm:$0xff] %vm726, %v683
        %730 = vst.msk [vmem:[%s250 + $0x18] sm:$0xff] %vm726, %v685
        %731 = vst.msk [vmem:[%s250 + $0x20] sm:$0xff] %vm726, %v687
        %732 = vst.msk [vmem:[%s250 + $0x28] sm:$0xff] %vm726, %v689
        %733 = vst.msk [vmem:[%s250 + $0x30] sm:$0xff] %vm726, %v691
        %734 = vst.msk [vmem:[%s250 + $0x38] sm:$0xff] %vm726, %v693
        %735 = vst.msk [vmem:[%s250 + $0x40] sm:$0xff] %vm726, %v695
        %736 = vst.msk [vmem:[%s250 + $0x48] sm:$0xff] %vm726, %v697
        %737 = vst.msk [vmem:[%s250 + $0x50] sm:$0xff] %vm726, %v699
        %738 = vst.msk [vmem:[%s250 + $0x58] sm:$0xff] %vm726, %v701
        %739 = vst.msk [vmem:[%s250 + $0x60] sm:$0xff] %vm726, %v703
        %740 = vst.msk [vmem:[%s250 + $0x68] sm:$0xff] %vm726, %v705
        %741 = vst.msk [vmem:[%s250 + $0x70] sm:$0xff] %vm726, %v707
        %742 = vst.msk [vmem:[%s250 + $0x78] sm:$0xff] %vm726, %v709
        %743 = vxpose.xlu0.b32.start [1/16] %v584, 128
        %744 = vxpose.xlu0.b32.cont [2/16] %v589, 128
        %745 = vxpose.xlu0.b32.cont [3/16] %v594, 128
        %746 = vxpose.xlu0.b32.cont [4/16] %v599, 128
        %747 = vxpose.xlu0.b32.cont [5/16] %v604, 128
        %748 = vxpose.xlu0.b32.cont [6/16] %v609, 128
        %749 = vxpose.xlu0.b32.cont [7/16] %v614, 128
        %750 = vxpose.xlu0.b32.cont [8/16] %v619, 128
        %751 = vxpose.xlu0.b32.cont [9/16] %v624, 128
        %752 = vxpose.xlu0.b32.cont [10/16] %v629, 128
        %753 = vxpose.xlu0.b32.cont [11/16] %v634, 128
        %754 = vxpose.xlu0.b32.cont [12/16] %v639, 128
        %755 = vxpose.xlu0.b32.cont [13/16] %v644, 128
        %756 = vxpose.xlu0.b32.cont [14/16] %v649, 128
        %757 = vxpose.xlu0.b32.cont [15/16] %v654, 128
        %758 = vxpose.xlu0.b32.end [16/16] %v659, 128
        %v759 = vpop.trf.xlu0
        %v760 = vpop.trf.xlu0
        %v761 = vpop.trf.xlu0
        %v762 = vpop.trf.xlu0
        %v763 = vpop.trf.xlu0
        %v764 = vpop.trf.xlu0
        %v765 = vpop.trf.xlu0
        %v766 = vpop.trf.xlu0
        %v767 = vpop.trf.xlu0
        %v768 = vpop.trf.xlu0
        %v769 = vpop.trf.xlu0
        %v770 = vpop.trf.xlu0
        %v771 = vpop.trf.xlu0
        %v772 = vpop.trf.xlu0
        %v773 = vpop.trf.xlu0
        %v774 = vpop.trf.xlu0
        %775 = vst [vmem:[%s226] sm:$0xf] %v759
        %vm776 = vcmask 7168
        %v777 = vsel %vm776, 1.0, 0.0
        %779 = vrot.lane.b32.xlu0 %v777, 8
        %v780 = vpop.permute.xlu0 %779
        %782 = vrot.lane.b32.xlu0 %v386, 8
        %v783 = vpop.permute.xlu0 %782
        %784 = vrot.lane.b32.xlu0 %v391, 8
        %v785 = vpop.permute.xlu0 %784
        %786 = vrot.lane.b32.xlu0 %v396, 8
        %v787 = vpop.permute.xlu0 %786
        %788 = vrot.lane.b32.xlu0 %v401, 8
        %v789 = vpop.permute.xlu0 %788
        %790 = vrot.lane.b32.xlu0 %v406, 8
        %v791 = vpop.permute.xlu0 %790
        %792 = vrot.lane.b32.xlu0 %v411, 8
        %v793 = vpop.permute.xlu0 %792
        %794 = vrot.lane.b32.xlu0 %v416, 8
        %v795 = vpop.permute.xlu0 %794
        %796 = vrot.lane.b32.xlu0 %v421, 8
        %v797 = vpop.permute.xlu0 %796
        %798 = vrot.lane.b32.xlu0 %v426, 8
        %v799 = vpop.permute.xlu0 %798
        %800 = vrot.lane.b32.xlu0 %v431, 8
        %v801 = vpop.permute.xlu0 %800
        %802 = vrot.lane.b32.xlu0 %v436, 8
        %v803 = vpop.permute.xlu0 %802
        %804 = vrot.lane.b32.xlu0 %v441, 8
        %v805 = vpop.permute.xlu0 %804
        %806 = vrot.lane.b32.xlu0 %v446, 8
        %v807 = vpop.permute.xlu0 %806
        %808 = vrot.lane.b32.xlu0 %v451, 8
        %v809 = vpop.permute.xlu0 %808
        %810 = vrot.lane.b32.xlu0 %v456, 8
        %v811 = vpop.permute.xlu0 %810
        %812 = vrot.lane.b32.xlu0 %v461, 8
        %v813 = vpop.permute.xlu0 %812
        %830 = vrot.lane.b32.xlu0 %v777, 24
        %v831 = vpop.permute.xlu0 %830
        %833 = vrot.lane.b32.xlu0 %v386, 16
        %v834 = vpop.permute.xlu0 %833
        %835 = vrot.lane.b32.xlu0 %v391, 16
        %v836 = vpop.permute.xlu0 %835
        %837 = vrot.lane.b32.xlu0 %v396, 16
        %v838 = vpop.permute.xlu0 %837
        %839 = vrot.lane.b32.xlu0 %v401, 16
        %v840 = vpop.permute.xlu0 %839
        %841 = vrot.lane.b32.xlu0 %v406, 16
        %v842 = vpop.permute.xlu0 %841
        %843 = vrot.lane.b32.xlu0 %v411, 16
        %v844 = vpop.permute.xlu0 %843
        %845 = vrot.lane.b32.xlu0 %v416, 16
        %v846 = vpop.permute.xlu0 %845
        %847 = vrot.lane.b32.xlu0 %v421, 16
        %v848 = vpop.permute.xlu0 %847
        %849 = vrot.lane.b32.xlu0 %v426, 16
        %v850 = vpop.permute.xlu0 %849
        %851 = vrot.lane.b32.xlu0 %v431, 16
        %v852 = vpop.permute.xlu0 %851
        %853 = vrot.lane.b32.xlu0 %v436, 16
        %v854 = vpop.permute.xlu0 %853
        %855 = vrot.lane.b32.xlu0 %v441, 16
        %v856 = vpop.permute.xlu0 %855
        %857 = vrot.lane.b32.xlu0 %v446, 16
        %v858 = vpop.permute.xlu0 %857
        %859 = vrot.lane.b32.xlu0 %v451, 16
        %v860 = vpop.permute.xlu0 %859
        %861 = vrot.lane.b32.xlu0 %v456, 16
        %v862 = vpop.permute.xlu0 %861
        %863 = vrot.lane.b32.xlu0 %v461, 16
        %v864 = vpop.permute.xlu0 %863
        %881 = vrot.lane.b32.xlu0 %v777, 40
        %v882 = vpop.permute.xlu0 %881
        %884 = vrot.lane.b32.xlu0 %v386, 24
        %v885 = vpop.permute.xlu0 %884
        %886 = vrot.lane.b32.xlu0 %v391, 24
        %v887 = vpop.permute.xlu0 %886
        %888 = vrot.lane.b32.xlu0 %v396, 24
        %v889 = vpop.permute.xlu0 %888
        %890 = vrot.lane.b32.xlu0 %v401, 24
        %v891 = vpop.permute.xlu0 %890
        %892 = vrot.lane.b32.xlu0 %v406, 24
        %v893 = vpop.permute.xlu0 %892
        %894 = vrot.lane.b32.xlu0 %v411, 24
        %v895 = vpop.permute.xlu0 %894
        %896 = vrot.lane.b32.xlu0 %v416, 24
        %v897 = vpop.permute.xlu0 %896
        %898 = vrot.lane.b32.xlu0 %v421, 24
        %v899 = vpop.permute.xlu0 %898
        %900 = vrot.lane.b32.xlu0 %v426, 24
        %v901 = vpop.permute.xlu0 %900
        %902 = vrot.lane.b32.xlu0 %v431, 24
        %v903 = vpop.permute.xlu0 %902
        %904 = vrot.lane.b32.xlu0 %v436, 24
        %v905 = vpop.permute.xlu0 %904
        %906 = vrot.lane.b32.xlu0 %v441, 24
        %v907 = vpop.permute.xlu0 %906
        %908 = vrot.lane.b32.xlu0 %v446, 24
        %v909 = vpop.permute.xlu0 %908
        %910 = vrot.lane.b32.xlu0 %v451, 24
        %v911 = vpop.permute.xlu0 %910
        %912 = vrot.lane.b32.xlu0 %v456, 24
        %v913 = vpop.permute.xlu0 %912
        %914 = vrot.lane.b32.xlu0 %v461, 24
        %v915 = vpop.permute.xlu0 %914
        %932 = vrot.lane.b32.xlu0 %v777, 56
        %v933 = vpop.permute.xlu0 %932
        %vm935 = vcmask 64512
        %v936 = vsel %vm935, %v386, %v780
        %v937 = vsel %vm935, %v391, %v780
        %v938 = vsel %vm935, %v396, %v780
        %v939 = vsel %vm935, %v401, %v780
        %v940 = vsel %vm935, %v406, %v780
        %v941 = vsel %vm935, %v411, %v780
        %v942 = vsel %vm935, %v416, %v780
        %v943 = vsel %vm935, %v421, %v780
        %v944 = vsel %vm935, %v426, %v780
        %v945 = vsel %vm935, %v431, %v780
        %v946 = vsel %vm935, %v436, %v780
        %v947 = vsel %vm935, %v441, %v780
        %v948 = vsel %vm935, %v446, %v780
        %v949 = vsel %vm935, %v451, %v780
        %v950 = vsel %vm935, %v456, %v780
        %v951 = vsel %vm935, %v461, %v780
        %v952 = vsel %vm270, %v936, %v783
        %v953 = vsel %vm270, %v937, %v785
        %v954 = vsel %vm270, %v938, %v787
        %v955 = vsel %vm270, %v939, %v789
        %v956 = vsel %vm270, %v940, %v791
        %v957 = vsel %vm270, %v941, %v793
        %v958 = vsel %vm270, %v942, %v795
        %v959 = vsel %vm270, %v943, %v797
        %v960 = vsel %vm270, %v944, %v799
        %v961 = vsel %vm270, %v945, %v801
        %v962 = vsel %vm270, %v946, %v803
        %v963 = vsel %vm270, %v947, %v805
        %v964 = vsel %vm270, %v948, %v807
        %v965 = vsel %vm270, %v949, %v809
        %v966 = vsel %vm270, %v950, %v811
        %v967 = vsel %vm270, %v951, %v813
        %vm968 = vcmask 195584
        %v969 = vsel %vm968, %v952, %v831
        %v970 = vsel %vm968, %v953, %v831
        %v971 = vsel %vm968, %v954, %v831
        %v972 = vsel %vm968, %v955, %v831
        %v973 = vsel %vm968, %v956, %v831
        %v974 = vsel %vm968, %v957, %v831
        %v975 = vsel %vm968, %v958, %v831
        %v976 = vsel %vm968, %v959, %v831
        %v977 = vsel %vm968, %v960, %v831
        %v978 = vsel %vm968, %v961, %v831
        %v979 = vsel %vm968, %v962, %v831
        %v980 = vsel %vm968, %v963, %v831
        %v981 = vsel %vm968, %v964, %v831
        %v982 = vsel %vm968, %v965, %v831
        %v983 = vsel %vm968, %v966, %v831
        %v984 = vsel %vm968, %v967, %v831
        %v985 = vsel %vm468, %v969, %v834
        %v986 = vsel %vm468, %v970, %v836
        %v987 = vsel %vm468, %v971, %v838
        %v988 = vsel %vm468, %v972, %v840
        %v989 = vsel %vm468, %v973, %v842
        %v990 = vsel %vm468, %v974, %v844
        %v991 = vsel %vm468, %v975, %v846
        %v992 = vsel %vm468, %v976, %v848
        %v993 = vsel %vm468, %v977, %v850
        %v994 = vsel %vm468, %v978, %v852
        %v995 = vsel %vm468, %v979, %v854
        %v996 = vsel %vm468, %v980, %v856
        %v997 = vsel %vm468, %v981, %v858
        %v998 = vsel %vm468, %v982, %v860
        %v999 = vsel %vm468, %v983, %v862
        %v1000 = vsel %vm468, %v984, %v864
        %vm1001 = vcmask 326656
        %v1002 = vsel %vm1001, %v985, %v882
        %v1003 = vsel %vm1001, %v986, %v882
        %v1004 = vsel %vm1001, %v987, %v882
        %v1005 = vsel %vm1001, %v988, %v882
        %v1006 = vsel %vm1001, %v989, %v882
        %v1007 = vsel %vm1001, %v990, %v882
        %v1008 = vsel %vm1001, %v991, %v882
        %v1009 = vsel %vm1001, %v992, %v882
        %v1010 = vsel %vm1001, %v993, %v882
        %v1011 = vsel %vm1001, %v994, %v882
        %v1012 = vsel %vm1001, %v995, %v882
        %v1013 = vsel %vm1001, %v996, %v882
        %v1014 = vsel %vm1001, %v997, %v882
        %v1015 = vsel %vm1001, %v998, %v882
        %v1016 = vsel %vm1001, %v999, %v882
        %v1017 = vsel %vm1001, %v1000, %v882
        %vm1018 = vcmask 392192
        %v1019 = vsel %vm1018, %v1002, %v885
        %v1020 = vsel %vm1018, %v1003, %v887
        %v1021 = vsel %vm1018, %v1004, %v889
        %v1022 = vsel %vm1018, %v1005, %v891
        %v1023 = vsel %vm1018, %v1006, %v893
        %v1024 = vsel %vm1018, %v1007, %v895
        %v1025 = vsel %vm1018, %v1008, %v897
        %v1026 = vsel %vm1018, %v1009, %v899
        %v1027 = vsel %vm1018, %v1010, %v901
        %v1028 = vsel %vm1018, %v1011, %v903
        %v1029 = vsel %vm1018, %v1012, %v905
        %v1030 = vsel %vm1018, %v1013, %v907
        %v1031 = vsel %vm1018, %v1014, %v909
        %v1032 = vsel %vm1018, %v1015, %v911
        %v1033 = vsel %vm1018, %v1016, %v913
        %v1034 = vsel %vm1018, %v1017, %v915
        %vm1035 = vcmask 457728
        %v1036 = vsel %vm1035, %v1019, %v933
        %v1037 = vsel %vm1035, %v1020, %v933
        %v1038 = vsel %vm1035, %v1021, %v933
        %v1039 = vsel %vm1035, %v1022, %v933
        %v1040 = vsel %vm1035, %v1023, %v933
        %v1041 = vsel %vm1035, %v1024, %v933
        %v1042 = vsel %vm1035, %v1025, %v933
        %v1043 = vsel %vm1035, %v1026, %v933
        %v1044 = vsel %vm1035, %v1027, %v933
        %v1045 = vsel %vm1035, %v1028, %v933
        %v1046 = vsel %vm1035, %v1029, %v933
        %v1047 = vsel %vm1035, %v1030, %v933
        %v1048 = vsel %vm1035, %v1031, %v933
        %v1049 = vsel %vm1035, %v1032, %v933
        %v1050 = vsel %vm1035, %v1033, %v933
        %v1051 = vsel %vm1035, %v1034, %v933
        %v1052 = vpack.c.bf16 %v1037, %v1036
        %v1053 = vpack.c.bf16 %v1039, %v1038
        %v1054 = vpack.c.bf16 %v1041, %v1040
        %v1055 = vpack.c.bf16 %v1043, %v1042
        %v1056 = vpack.c.bf16 %v1045, %v1044
        %v1057 = vpack.c.bf16 %v1047, %v1046
        %v1058 = vpack.c.bf16 %v1049, %v1048
        %v1059 = vpack.c.bf16 %v1051, %v1050
        %v1068 = vunpack.c.l.b16 %v1052
        %v1069 = vunpack.c.h.b16 %v1052
        %v1070 = vunpack.c.l.b16 %v1053
        %v1071 = vunpack.c.h.b16 %v1053
        %v1072 = vunpack.c.l.b16 %v1054
        %v1073 = vunpack.c.h.b16 %v1054
        %v1074 = vunpack.c.l.b16 %v1055
        %v1075 = vunpack.c.h.b16 %v1055
        %v1076 = vunpack.c.l.b16 %v1056
        %v1077 = vunpack.c.h.b16 %v1056
        %v1078 = vunpack.c.l.b16 %v1057
        %v1079 = vunpack.c.h.b16 %v1057
        %v1080 = vunpack.c.l.b16 %v1058
        %v1081 = vunpack.c.h.b16 %v1058
        %v1082 = vunpack.c.l.b16 %v1059
        %v1083 = vunpack.c.h.b16 %v1059
        %v1084 = vpack.c.b16 %v1068, %v1068
        %v1085 = vpack.c.b16 %v1069, %v1069
        %v1086 = vpack.c.b16 %v1070, %v1070
        %v1087 = vpack.c.b16 %v1071, %v1071
        %v1088 = vpack.c.b16 %v1072, %v1072
        %v1089 = vpack.c.b16 %v1073, %v1073
        %v1090 = vpack.c.b16 %v1074, %v1074
        %v1091 = vpack.c.b16 %v1075, %v1075
        %v1092 = vpack.c.b16 %v1076, %v1076
        %v1093 = vpack.c.b16 %v1077, %v1077
        %v1094 = vpack.c.b16 %v1078, %v1078
        %v1095 = vpack.c.b16 %v1079, %v1079
        %v1096 = vpack.c.b16 %v1080, %v1080
        %v1097 = vpack.c.b16 %v1081, %v1081
        %v1098 = vpack.c.b16 %v1082, %v1082
        %v1099 = vpack.c.b16 %v1083, %v1083
        %vm1116 = vcmask 519168
        %1117 = vst.msk [vmem:[%s244] sm:$0xf] %vm1116, %v1084
        %1118 = vst.msk [vmem:[%s244 + $0x4] sm:$0xf] %vm1116, %v1085
        %1119 = vst.msk [vmem:[%s244 + $0x8] sm:$0xf] %vm1116, %v1086
        %1120 = vst.msk [vmem:[%s244 + $0xc] sm:$0xf] %vm1116, %v1087
        %1121 = vst.msk [vmem:[%s244 + $0x10] sm:$0xf] %vm1116, %v1088
        %1122 = vst.msk [vmem:[%s244 + $0x14] sm:$0xf] %vm1116, %v1089
        %1123 = vst.msk [vmem:[%s244 + $0x18] sm:$0xf] %vm1116, %v1090
        %1124 = vst.msk [vmem:[%s244 + $0x1c] sm:$0xf] %vm1116, %v1091
        %1125 = vst.msk [vmem:[%s244 + $0x20] sm:$0xf] %vm1116, %v1092
        %1126 = vst.msk [vmem:[%s244 + $0x24] sm:$0xf] %vm1116, %v1093
        %1127 = vst.msk [vmem:[%s244 + $0x28] sm:$0xf] %vm1116, %v1094
        %1128 = vst.msk [vmem:[%s244 + $0x2c] sm:$0xf] %vm1116, %v1095
        %1129 = vst.msk [vmem:[%s244 + $0x30] sm:$0xf] %vm1116, %v1096
        %1130 = vst.msk [vmem:[%s244 + $0x34] sm:$0xf] %vm1116, %v1097
        %1131 = vst.msk [vmem:[%s244 + $0x38] sm:$0xf] %vm1116, %v1098
        %1132 = vst.msk [vmem:[%s244 + $0x3c] sm:$0xf] %vm1116, %v1099
        %s1133 = smul.u32 16, %s20
        %p1134 = scmp.lt.s32.totalorder %s1133, 47
        %s1135 = scalar_select %p1134, %s1133, 47
        %s1136 = smul.addr %s1135, 4
        %s1137 = scalar_lea.vmem %s3, %s1136
        %s1138 = sand.u32 %s122, 1
        %s1139 = scalar_lea.sflag [#allocation3], %s1138
        %s1140 = sand.u32 %s122, 1
        %s1141 = smul.addr %s1140, 4
        %s1142 = scalar_lea.vmem [#allocation2], %s1141
        %s1143 = smul.u32 16, %s20
        %p1144 = scmp.lt.s32.totalorder %s1143, 47
        %s1145 = scalar_select %p1144, %s1143, 47
        %s1146 = smul.addr %s1145, 8
        %s1147 = scalar_lea.vmem %s5, %s1146
        // Predicated region
        $region33: #{tpu_custom_call.1} parent=31 // pred_check
          %p1148 = pneg %p106
        $region34: #{tpu_custom_call.1} parent=31 // pred_check_branch
          %1150 = sbr.rel (%p1148) target = $region36
        $region35: #{tpu_custom_call.1} parent=31 // pred_region
          %s1151 = smul.u32 16, %s20
        $region36: #{tpu_custom_call.1} parent=31 // pred_fallthru
          _
        // Predicated region
        $region37: #{tpu_custom_call.1} parent=31 // pred_check
          %p1152 = pneg %p132
        $region38: #{tpu_custom_call.1} parent=31 // pred_check_branch
          %1154 = sbr.rel (%p1152) target = $region40
        $region39: #{tpu_custom_call.1} parent=31 // pred_region
          %s1156 = ssub.s32 64, 64
          %1157 = vsyncadd %s1139, %s1156
          %s1158 = smul.addr %s20, 64
          %s1159 = scalar_lea.hbm %s4, %s1158
          %s1161 = sshll.u32 %s1142, 4
          %s1162 = int_to_ptr.vmem [resolvable:$true] %s1161
          %1164 = dma.vmem_to_hbm [thread:$0]  %s1162, 64, %s1159, %s1139
        $region40: #{tpu_custom_call.1} parent=31 // pred_fallthru
          _
        // Predicated region
        $region41: #{tpu_custom_call.1} parent=31 // pred_check
          %p1165 = pneg %p158
        $region42: #{tpu_custom_call.1} parent=31 // pred_check_branch
          %1167 = sbr.rel (%p1165) target = $region44
        $region43: #{tpu_custom_call.1} parent=31 // pred_region
          %s1168 = smul.u32 16, %s20
        $region44: #{tpu_custom_call.1} parent=31 // pred_fallthru
          _
      $region32: #{tpu_custom_call.1} parent=5 // pred_fallthru
        _
      %p1169 = scmp.le.s32.totalorder 2, %s15
      // Predicated region
      $region45: #{tpu_custom_call.1} parent=5 // pred_check
        %p1170 = pneg %p1169
      $region46: #{tpu_custom_call.1} parent=5 // pred_check_branch
        %1172 = sbr.rel (%p1170) target = $region48
      $region47: #{tpu_custom_call.1} parent=5 // pred_region
        %s1173 = ssub.s32 %s15, 2
        // Predicated region
        $region49: #{tpu_custom_call.1} parent=47 // pred_check
          %p1174 = pneg %p112
        $region50: #{tpu_custom_call.1} parent=47 // pred_check_branch
          %1176 = sbr.rel (%p1174) target = $region52
        $region51: #{tpu_custom_call.1} parent=47 // pred_region
          %s1177 = smul.u32 16, %s21
          %p1178 = scmp.lt.s32.totalorder %s1177, 47
          %s1179 = scalar_select %p1178, %s1177, 47
          %s1180 = smul.addr %s1179, 4
          %s1181 = scalar_lea.vmem %s3, %s1180
        $region52: #{tpu_custom_call.1} parent=47 // pred_fallthru
          _
        // Predicated region
        $region53: #{tpu_custom_call.1} parent=47 // pred_check
          %p1182 = pneg %p138
        $region54: #{tpu_custom_call.1} parent=47 // pred_check_branch
          %1184 = sbr.rel (%p1182) target = $region56
        $region55: #{tpu_custom_call.1} parent=47 // pred_region
          %s1185 = sand.u32 %s123, 1
          %s1186 = scalar_lea.sflag [#allocation3], %s1185
          %s1187 = sand.u32 %s123, 1
          %s1188 = smul.addr %s1187, 4
          %s1189 = scalar_lea.vmem [#allocation2], %s1188
          %1190 = dma.done %s1186, 64
        $region56: #{tpu_custom_call.1} parent=47 // pred_fallthru
          _
        // Predicated region
        $region57: #{tpu_custom_call.1} parent=47 // pred_check
          %p1191 = pneg %p164
        $region58: #{tpu_custom_call.1} parent=47 // pred_check_branch
          %1193 = sbr.rel (%p1191) target = $region60
        $region59: #{tpu_custom_call.1} parent=47 // pred_region
          %s1194 = smul.u32 16, %s21
          %p1195 = scmp.lt.s32.totalorder %s1194, 47
          %s1196 = scalar_select %p1195, %s1194, 47
          %s1197 = smul.addr %s1196, 8
          %s1198 = scalar_lea.vmem %s5, %s1197
        $region60: #{tpu_custom_call.1} parent=47 // pred_fallthru
          _
      $region48: #{tpu_custom_call.1} parent=5 // pred_fallthru
        _
    $region6: #{tpu_custom_call.1} parent=1 // loop_footer
      %s19 = sadd.s32 1, %s15
    $region7: #{tpu_custom_call.1} parent=1 // loop_footer_branch
      %14 = sbr.rel target = $region3
    $region8: #{tpu_custom_call.1} parent=1 // loop_exit
      _
    %1199 = vsyncpa [#allocation3], 1
    %s1200 = scalar_lea.sflag [#allocation3], 1
    %1201 = vsyncpa %s1200, 1

</llo_original>
